<compile_context>
chip_gen: v7x
topology: tpu7x:2x2x1
jax: 0.10.0
libtpu: 0.0.40
codegen_flags: <defaults>
</compile_context>

<pallas_src>
import jax
import jax.numpy as jnp
from jax import lax
from jax.experimental import pallas as pl
from jax.experimental.pallas import tpu as pltpu


def _onehot_gather(idx_block, emb_block):
    """Gather rows of emb_block via a one-hot MXU matmul.

    idx_block : (tm, 1) int32 token ids
    emb_block : (vocab, V) embedding table (VMEM resident)
    returns   : (tm, V) float32 logits
    """
    tm = idx_block.shape[0]
    vocab = emb_block.shape[0]
    cols = lax.broadcasted_iota(jnp.int32, (tm, vocab), 1)
    onehot = (idx_block == cols).astype(emb_block.dtype)
    return jnp.dot(onehot, emb_block, preferred_element_type=jnp.float32)


def _logits_kernel(idx_ref, emb_ref, logits_ref):
    logits = _onehot_gather(idx_ref[...], emb_ref[...])
    logits_ref[...] = logits.astype(logits_ref.dtype)


def _logits_loss_kernel(idx_ref, tgt_ref, emb_ref, logits_ref, nll_ref):
    logits = _onehot_gather(idx_ref[...], emb_ref[...])        # (tm, V) f32
    logits_ref[...] = logits.astype(logits_ref.dtype)

    # Fused cross-entropy: per-row negative log-likelihood (f32 throughout).
    tm, V = logits.shape
    m = jnp.max(logits, axis=-1, keepdims=True)
    lse = m + jnp.log(jnp.sum(jnp.exp(logits - m), axis=-1, keepdims=True))
    tgt_cols = lax.broadcasted_iota(jnp.int32, (tm, V), 1)
    tgt_onehot = tgt_ref[...] == tgt_cols
    tgt_logit = jnp.sum(jnp.where(tgt_onehot, logits, 0.0), axis=-1,
                        keepdims=True)
    nll_ref[...] = lse - tgt_logit


def bigram_v1_forward(index, emb_table, targets=None, *, tm=256):
    """index: (B, T) int32; emb_table: (vocab, vocab) float.

    Matches BigramLanguageModelV1.forward:
      targets is None  -> (logits (B, T, vocab), None)
      targets given    -> (logits (B*T, vocab), scalar cross-entropy loss)
    """
    B, T = index.shape
    vocab, V = emb_table.shape
    BT = B * T

    # Block size: multiple of 8 sublanes, clamped to the (padded) token count.
    tm_eff = max(8, min(tm, pl.cdiv(BT, 8) * 8))
    BT_pad = pl.cdiv(BT, tm_eff) * tm_eff
    n_blocks = BT_pad // tm_eff

    idx = index.reshape(BT, 1).astype(jnp.int32)
    if BT_pad != BT:
        idx = jnp.pad(idx, ((0, BT_pad - BT), (0, 0)))   # pad with row 0

    # VMEM budget: resident table + double-buffered (tm, V) logits blocks.
    bytes_needed = (vocab * V * emb_table.dtype.itemsize
                    + 2 * tm_eff * V * 4
                    + 8 * tm_eff * 4)
    compiler_kwargs = {"dimension_semantics": ("parallel",)}
    if bytes_needed > 12 * 1024 * 1024:
        # Raise the scoped-VMEM limit above the 16/32 MiB defaults when the
        # resident table actually needs it (cap well under physical VMEM).
        compiler_kwargs["vmem_limit_bytes"] = min(
            int(2 * bytes_needed), 100 * 1024 * 1024)
    cparams = pltpu.CompilerParams(**compiler_kwargs)

    emb_spec = pl.BlockSpec((vocab, V), lambda i: (0, 0))      # VMEM resident
    idx_spec = pl.BlockSpec((tm_eff, 1), lambda i: (i, 0))
    logits_spec = pl.BlockSpec((tm_eff, V), lambda i: (i, 0))
    nll_spec = pl.BlockSpec((tm_eff, 1), lambda i: (i, 0))

    if targets is None:
        out = pl.pallas_call(
            _logits_kernel,
            out_shape=jax.ShapeDtypeStruct((BT_pad, V), emb_table.dtype),
            grid_spec=pltpu.PrefetchScalarGridSpec(
                num_scalar_prefetch=0,
                grid=(n_blocks,),
                in_specs=[idx_spec, emb_spec],
                out_specs=logits_spec,
            ),
            compiler_params=cparams,
        )(idx, emb_table)
        logits = out[:BT].reshape(B, T, V)
        return logits, None

    tgt = targets.reshape(BT, 1).astype(jnp.int32)
    if BT_pad != BT:
        tgt = jnp.pad(tgt, ((0, BT_pad - BT), (0, 0)))

    logits_out, nll = pl.pallas_call(
        _logits_loss_kernel,
        out_shape=(
            jax.ShapeDtypeStruct((BT_pad, V), emb_table.dtype),
            jax.ShapeDtypeStruct((BT_pad, 1), jnp.float32),
        ),
        grid_spec=pltpu.PrefetchScalarGridSpec(
            num_scalar_prefetch=0,
            grid=(n_blocks,),
            in_specs=[idx_spec, idx_spec, emb_spec],
            out_specs=(logits_spec, nll_spec),
        ),
        compiler_params=cparams,
    )(idx, tgt, emb_table)

    logits = logits_out[:BT]                       # (B*T, vocab), as in PyTorch
    loss = jnp.sum(nll[:BT, 0]) / jnp.float32(BT)  # mean over valid rows
    return logits, loss


if __name__ == "__main__":
    # Small shapes consistent with the module; vocab multiple of 128 so each
    # logits row is lane-dense.
    vocab_size = 128
    B, T = 2, 8

    key = jax.random.PRNGKey(0)
    k_emb, k_idx, k_tgt = jax.random.split(key, 3)

    # nn.Embedding default init ~ N(0, 1)
    emb_table = jax.random.normal(k_emb, (vocab_size, vocab_size), jnp.float32)
    index = jax.random.randint(k_idx, (B, T), 0, vocab_size, dtype=jnp.int32)

    # targets=None path (pure forward)
    logits, loss = bigram_v1_forward(index, emb_table)
    logits = jax.block_until_ready(logits)

    ref = jnp.take(emb_table, index, axis=0)            # (B, T, vocab)
    assert logits.shape == (B, T, vocab_size)
    assert jnp.allclose(logits, ref, atol=1e-5, rtol=1e-5)
    assert loss is None

    # targets path (gather + fused cross-entropy in-kernel)
    targets = jax.random.randint(k_tgt, (B, T), 0, vocab_size, dtype=jnp.int32)
    logits2, loss2 = bigram_v1_forward(index, emb_table, targets)
    loss2 = jax.block_until_ready(loss2)

    ref_flat = ref.reshape(-1, vocab_size)
    assert logits2.shape == (B * T, vocab_size)
    assert jnp.allclose(logits2, ref_flat, atol=1e-5, rtol=1e-5)

    lp_ref = jax.nn.log_softmax(ref_flat.astype(jnp.float32), axis=-1)
    loss_ref = -jnp.mean(
        jnp.take_along_axis(lp_ref, targets.reshape(-1, 1), axis=-1))
    assert jnp.allclose(loss2, loss_ref, atol=1e-5, rtol=1e-5)

    print("KERNEL_OK")
</pallas_src>

<mosaic_0001>
module attributes {stable_mosaic.version = 11 : i64} {
  func.func @_logits_kernel(%arg0: i32, %arg1: memref<16x1xi32, #tpu.memory_space<vmem>>, %arg2: memref<128x128xf32, #tpu.memory_space<vmem>>, %arg3: memref<16x128xf32, #tpu.memory_space<vmem>>) attributes {dimension_semantics = [#tpu.dimension_semantics<parallel>], iteration_bounds = array<i64: 1>, scalar_prefetch = 0 : i64, scratch_operands = 0 : i64, tpu.core_type = #tpu.core_type<tc>, window_params = [{transform_indices = @transform_0, window_bounds = array<i64: 16, 1>}, {pipeline_mode = #tpu.pipeline_mode<synchronous>, transform_indices = @transform_1, window_bounds = array<i64: 128, 128>}, {transform_indices = @transform_2, window_bounds = array<i64: 16, 128>}]} {
    %c0 = arith.constant 0 : index
    %c0_0 = arith.constant 0 : index
    %0 = vector.load %arg1[%c0, %c0_0] : memref<16x1xi32, #tpu.memory_space<vmem>>, vector<16x1xi32>
    %c0_1 = arith.constant 0 : index
    %c0_2 = arith.constant 0 : index
    %1 = vector.load %arg2[%c0_1, %c0_2] : memref<128x128xf32, #tpu.memory_space<vmem>>, vector<128x128xf32>
    %2 = tpu.iota {dimensions = array<i32: 1>} : vector<16x128xi32>
    %3 = vector.broadcast %0 : vector<16x1xi32> to vector<16x128xi32>
    %4 = arith.cmpi eq, %3, %2 : vector<16x128xi32>
    %5 = arith.extui %4 : vector<16x128xi1> to vector<16x128xi32>
    %6 = arith.sitofp %5 : vector<16x128xi32> to vector<16x128xf32>
    %cst = arith.constant dense<0.000000e+00> : vector<16x128xf32>
    %7 = tpu.matmul %6, %1, %cst {dimension_numbers = #tpu.dot_dimension_numbers<[1], [0], [0], [1], [0, 0, 1, 1], [], []>} : vector<16x128xf32>, vector<128x128xf32>, vector<16x128xf32> -> vector<16x128xf32>
    %c0_3 = arith.constant 0 : index
    %c0_4 = arith.constant 0 : index
    %8 = vector.load %arg3[%c0_3, %c0_4] : memref<16x128xf32, #tpu.memory_space<vmem>>, vector<16x128xf32>
    tpu.vector_store %arg3[%c0_3, %c0_4], %7 {strides = array<i32>} : memref<16x128xf32, #tpu.memory_space<vmem>>, vector<16x128xf32>,
    return
  }
  func.func @transform_0(%arg0: i32) -> (i32, i32) {
    %c0_i32 = arith.constant 0 : i32
    %c0_i32_0 = arith.constant 0 : i32
    return %arg0, %c0_i32 : i32, i32
  }
  func.func @transform_1(%arg0: i32) -> (i32, i32) {
    %c0_i32 = arith.constant 0 : i32
    %c0_i32_0 = arith.constant 0 : i32
    %c0_i32_1 = arith.constant 0 : i32
    return %c0_i32, %c0_i32_0 : i32, i32
  }
  func.func @transform_2(%arg0: i32) -> (i32, i32) {
    %c0_i32 = arith.constant 0 : i32
    %c0_i32_0 = arith.constant 0 : i32
    return %arg0, %c0_i32 : i32, i32
  }
}

</mosaic_0001>

<llo_original>
// kernel: tpu_custom_call.1
$region0: #{tpu_custom_call.1}
  #allocation0 [shape = 'u32[]', space=smem, size = 0x4, offset = 0x4, fixed_abs, tag = 'smem constant byte address 0x4 - core index']
  #allocation1 [shape = 'u32[144,128]{1,0:T(1,128)}', space=vmem, size = 0x12000, scoped, tag = 'internal scratch']
  %s0 = inlined_call_operand.vmem [shape: s32[16,1], index: 0, kind: input, shape index: {}]
  %s1 = inlined_call_operand.hbm [shape: f32[128,128], index: 1, kind: input, shape index: {}]
  %s2 = inlined_call_operand.hbm [shape: f32[16,128], index: 2, kind: output, shape index: {}]
  %s3 = sld [smem:[#allocation0]]
  $region22: #{tpu_custom_call.1} parent=0
    _
  %s5 = ssub.s32 1, %s3
  %s6 = scalar_select 0, %s5, %s3
  $region1: #{tpu_custom_call.1} parent=0
    #allocation2 [shape = 'u8[65536]{0}', space=vmem, size = 0x10000, scoped, tag = 'input window, operand 1, single buffered']
    #allocation3 [shape = 's32[1]{0}', space=sflag, size = 0x4, scoped, tag = 'scoped memory for tpu_custom_call.1']
    #allocation4 [shape = 's32[1]{0}', space=sflag, size = 0x4, scoped, tag = 'scoped memory for tpu_custom_call.1']
    #allocation5 [shape = 'u8[8192]{0}', space=vmem, size = 0x2000, scoped, tag = 'output window, operand 0, single buffered']
    %7 = vsyncpa [#allocation3], 0
    %8 = vsyncpa [#allocation4], 0
    // Predicated region
    $region2: #{tpu_custom_call.1} parent=1 // pred_check
      _
    $region3: #{tpu_custom_call.1} parent=1 // pred_check_branch
      %10 = sbr.rel (0) target = $region5
    $region4: #{tpu_custom_call.1} parent=1 // pred_region
      _
    $region5: #{tpu_custom_call.1} parent=1 // pred_fallthru
      _
    // Predicated region
    $region6: #{tpu_custom_call.1} parent=1 // pred_check
      _
    $region7: #{tpu_custom_call.1} parent=1 // pred_check_branch
      %12 = sbr.rel (0) target = $region9
    $region8: #{tpu_custom_call.1} parent=1 // pred_region
      %s14 = ssub.s32 2048, 2048
      %15 = vsyncadd [#allocation3], %s14
      %s16 = sshll.u32 [#allocation2], 4
      %s17 = int_to_ptr.vmem [resolvable:$true] %s16
      %22 = dma.hbm_to_vmem [thread:$0]  %s1, 2048, %s17, [#allocation3], 128, 128, 8
    $region9: #{tpu_custom_call.1} parent=1 // pred_fallthru
      _
    // Predicated region
    $region10: #{tpu_custom_call.1} parent=1 // pred_check
      _
    $region11: #{tpu_custom_call.1} parent=1 // pred_check_branch
      %24 = sbr.rel (0) target = $region13
    $region12: #{tpu_custom_call.1} parent=1 // pred_region
      %25 = dma.done [#allocation3], 2048
    $region13: #{tpu_custom_call.1} parent=1 // pred_fallthru
      _
    %v26 = vld [vmem:[%s0] sm:$0xff]
    %v27 = vld [vmem:[%s0 + $0x8] sm:$0xff]
    %v28 = vld [vmem:[#allocation2] sm:$0xff]
    %v29 = vld [vmem:[#allocation2 + $0x8] sm:$0xff]
    %v30 = vld [vmem:[#allocation2 + $0x10] sm:$0xff]
    %v31 = vld [vmem:[#allocation2 + $0x18] sm:$0xff]
    %v32 = vld [vmem:[#allocation2 + $0x20] sm:$0xff]
    %v33 = vld [vmem:[#allocation2 + $0x28] sm:$0xff]
    %v34 = vld [vmem:[#allocation2 + $0x30] sm:$0xff]
    %v35 = vld [vmem:[#allocation2 + $0x38] sm:$0xff]
    %v36 = vld [vmem:[#allocation2 + $0x40] sm:$0xff]
    %v37 = vld [vmem:[#allocation2 + $0x48] sm:$0xff]
    %v38 = vld [vmem:[#allocation2 + $0x50] sm:$0xff]
    %v39 = vld [vmem:[#allocation2 + $0x58] sm:$0xff]
    %v40 = vld [vmem:[#allocation2 + $0x60] sm:$0xff]
    %v41 = vld [vmem:[#allocation2 + $0x68] sm:$0xff]
    %v42 = vld [vmem:[#allocation2 + $0x70] sm:$0xff]
    %v43 = vld [vmem:[#allocation2 + $0x78] sm:$0xff]
    %v44 = vlaneseq
    %v45 = vand.u32 %v44, 127
    %46 = vset.pattern.permute.xlu0 0
    %47 = vperm.xlu0 %46, %v26
    %v48 = vpop.permute.xlu0 %47
    %49 = vset.pattern.permute.xlu0 0
    %50 = vperm.xlu0 %49, %v27
    %v51 = vpop.permute.xlu0 %50
    %vm52 = vcmp.eq.s32.totalorder %v48, %v45
    %vm53 = vcmp.eq.s32.totalorder %v51, %v45
    %v54 = vsel %vm52, 1, 0
    %v55 = vsel %vm53, 1, 0
    %v56 = vcvt.s32.f32 %v54
    %v57 = vcvt.s32.f32 %v55
    %58 = vmatprep.subr.mxu0 0.0
    %59 = vmatpush1.msra.mxu0 %v28
    %60 = vmatprep.subr.mxu0 0.0
    %61 = vmatpush1.msra.mxu0 %v29
    %62 = vmatprep.subr.mxu0 0.0
    %63 = vmatpush1.msra.mxu0 %v30
    %64 = vmatprep.subr.mxu0 0.0
    %65 = vmatpush1.msra.mxu0 %v31
    %66 = vmatprep.subr.mxu0 0.0
    %67 = vmatpush1.msra.mxu0 %v32
    %68 = vmatprep.subr.mxu0 0.0
    %69 = vmatpush1.msra.mxu0 %v33
    %70 = vmatprep.subr.mxu0 0.0
    %71 = vmatpush1.msra.mxu0 %v34
    %72 = vmatprep.subr.mxu0 0.0
    %73 = vmatpush1.msra.mxu0 %v35
    %74 = vmatprep.subr.mxu0 0.0
    %75 = vmatpush1.msra.mxu0 %v36
    %76 = vmatprep.subr.mxu0 0.0
    %77 = vmatpush1.msra.mxu0 %v37
    %78 = vmatprep.subr.mxu0 0.0
    %79 = vmatpush1.msra.mxu0 %v38
    %80 = vmatprep.subr.mxu0 0.0
    %81 = vmatpush1.msra.mxu0 %v39
    %82 = vmatprep.subr.mxu0 0.0
    %83 = vmatpush1.msra.mxu0 %v40
    %84 = vmatprep.subr.mxu0 0.0
    %85 = vmatpush1.msra.mxu0 %v41
    %86 = vmatprep.subr.mxu0 0.0
    %87 = vmatpush1.msra.mxu0 %v42
    %88 = vmatprep.subr.mxu0 0.0
    %89 = vmatpush1.msra.mxu0 %v43
    %90 = vmatprep.subr.mxu0 0.0
    %91 = vmatpush1.msra.mxu0 0.0
    %92 = vmatprep.subr.mxu0 0.0
    %93 = vmatpush1.msra.mxu0 0.0
    %94 = vmatprep.subr.mxu0 0.0
    %95 = vmatpush1.msra.mxu0 0.0
    %96 = vmatprep.subr.mxu0 0.0
    %97 = vmatpush1.msra.mxu0 0.0
    %98 = vmatprep.subr.mxu0 0.0
    %99 = vmatpush1.msra.mxu0 0.0
    %100 = vmatprep.subr.mxu0 0.0
    %101 = vmatpush1.msra.mxu0 0.0
    %102 = vmatprep.subr.mxu0 0.0
    %103 = vmatpush1.msra.mxu0 0.0
    %104 = vmatprep.subr.mxu0 0.0
    %105 = vmatpush1.msra.mxu0 0.0
    %106 = vmatprep.subr.mxu0 0.0
    %107 = vmatpush1.msra.mxu0 0.0
    %108 = vmatprep.subr.mxu0 0.0
    %109 = vmatpush1.msra.mxu0 0.0
    %110 = vmatprep.subr.mxu0 0.0
    %111 = vmatpush1.msra.mxu0 0.0
    %112 = vmatprep.subr.mxu0 0.0
    %113 = vmatpush1.msra.mxu0 0.0
    %114 = vmatprep.subr.mxu0 0.0
    %115 = vmatpush1.msra.mxu0 0.0
    %116 = vmatprep.subr.mxu0 0.0
    %117 = vmatpush1.msra.mxu0 0.0
    %118 = vmatprep.subr.mxu0 0.0
    %119 = vmatpush1.msra.mxu0 0.0
    %120 = vmatprep.subr.mxu0 0.0
    %121 = vmatpush1.msra.mxu0 0.0
    %122 = vmatprep.mubr.f32.mxu0 0.0
    %123 = vmatmul.mubr.f32.gmra.mrb[0].mxu0 %v56
    %v124 = vpop.f32.mrb[0].mxu0
    %v125 = vadd.f32 0.0, %v124
    %v126 = vpop.f32.mrb[0].mxu0
    %127 = vmatprep.mubr.f32.mxu0 0.0
    %128 = vmatmul.mubr.f32.gmra.mrb[0].mxu0 %v57
    %v129 = vpop.f32.mrb[0].mxu0
    %v130 = vadd.f32 0.0, %v129
    %v131 = vpop.f32.mrb[0].mxu0
    %132 = vdwg.mxu0
    %133 = vst [vmem:[#allocation5] sm:$0xff] %v125
    %134 = vst [vmem:[#allocation5 + $0x8] sm:$0xff] %v130
    // Predicated region
    $region14: #{tpu_custom_call.1} parent=1 // pred_check
      _
    $region15: #{tpu_custom_call.1} parent=1 // pred_check_branch
      %136 = sbr.rel (0) target = $region17
    $region16: #{tpu_custom_call.1} parent=1 // pred_region
      %s138 = ssub.s32 256, 256
      %139 = vsyncadd [#allocation4], %s138
      %s140 = sshll.u32 [#allocation5], 4
      %s141 = int_to_ptr.vmem [resolvable:$true] %s140
      %146 = dma.vmem_to_hbm [thread:$0]  %s141, 256, %s2, [#allocation4], 128, 128, 8
    $region17: #{tpu_custom_call.1} parent=1 // pred_fallthru
      _
    // Predicated region
    $region18: #{tpu_custom_call.1} parent=1 // pred_check
      _
    $region19: #{tpu_custom_call.1} parent=1 // pred_check_branch
      %148 = sbr.rel (0) target = $region21
    $region20: #{tpu_custom_call.1} parent=1 // pred_region
      %149 = dma.done [#allocation4], 256
    $region21: #{tpu_custom_call.1} parent=1 // pred_fallthru
      _
    %150 = vsyncpa [#allocation3], 1
    %151 = vsyncpa [#allocation4], 1

</llo_original>
